<compile_context>
chip_gen: v7x
topology: tpu7x:2x2x1
jax: 0.10.0
libtpu: 0.0.40
codegen_flags: <defaults>
</compile_context>

<pallas_src>
import functools

import jax
import jax.numpy as jnp
import numpy as np
from jax.experimental import pallas as pl
from jax.experimental.pallas import tpu as pltpu

_LANE = 128
# Explicit scoped-VMEM cap: above v5e's 16 MiB default, far below every
# generation's physical VMEM (v5e/v6e 128 MiB, v7x 64 MiB per TensorCore).
_VMEM_LIMIT_BYTES = 32 * 1024 * 1024


# ----------------------------------------------------------------------------
# Helpers
# ----------------------------------------------------------------------------
def _round_up(v, m):
    return ((v + m - 1) // m) * m


def _tensorcores_per_chip():
    """Best-effort detection of multi-TensorCore chips (v7x / megacore parts).
    Only used to decide whether to add a 'parallel' row-split axis to the fused
    GEMM+stats kernel; returning 1 is always correct."""
    try:
        kind = jax.devices()[0].device_kind.lower()
    except Exception:
        return 1
    if any(tag in kind for tag in ("v7", "7x", "v4", "v5p")):
        return 2
    return 1


def _pick_lane_tile(n_cols, bytes_per_lane, budget_bytes, max_tile=2048):
    """Largest lane tile (multiple of 128) whose estimated live VMEM footprint
    (bytes_per_lane * tile: double-buffered blocks + f32 temporaries) stays
    under budget_bytes.  Prefers a tile that divides n_cols; otherwise returns
    (tile, padded n_cols)."""
    cap = max(_LANE, min(max_tile,
                         budget_bytes // max(int(bytes_per_lane), 1),
                         _round_up(n_cols, _LANE)))
    cands = [t for t in (4096, 2048, 1024, 512, 256, 128) if t <= cap]
    for t in cands:
        if n_cols % t == 0:
            return t, n_cols
    t = cands[0]
    return t, _round_up(n_cols, t)


# ----------------------------------------------------------------------------
# Pallas kernels
# ----------------------------------------------------------------------------
def _tconv_stats_kernel(w_ref, x_ref, y_ref, sum_ref, sq_ref, *, lane_groups):
    # w_ref: (TR, Cin) bf16 (constant index across the inner grid axes),
    # x_ref: (1, Cin, THW) bf16, y_ref: (1, TR, THW) bf16,
    # sum_ref / sq_ref: (TR, 128) f32 output-resident BatchNorm accumulators.
    y = jnp.dot(w_ref[...], x_ref[0], preferred_element_type=jnp.float32)
    y_ref[0] = y.astype(y_ref.dtype)          # bf16 activation writeback

    @pl.when(jnp.logical_and(pl.program_id(1) == 0, pl.program_id(2) == 0))
    def _():
        sum_ref[...] = jnp.zeros_like(sum_ref)
        sq_ref[...] = jnp.zeros_like(sq_ref)

    # 128-lane partial sums: lane-aligned static slices + pure VPU adds; the
    # single cross-lane 128->1 reduce happens once outside the kernel.
    s = sum_ref[...]
    q = sq_ref[...]
    for j in range(lane_groups):
        blk = y[:, j * _LANE:(j + 1) * _LANE]
        s = s + blk
        q = q + blk * blk
    sum_ref[...] = s
    sq_ref[...] = q


def _stats_kernel(x_ref, sum_ref, sq_ref, *, lane_groups):
    # Standalone per-channel sum / sum-of-squares (skip tensor, mode == 0).
    @pl.when(jnp.logical_and(pl.program_id(0) == 0, pl.program_id(1) == 0))
    def _():
        sum_ref[...] = jnp.zeros_like(sum_ref)
        sq_ref[...] = jnp.zeros_like(sq_ref)

    x = x_ref[0].astype(jnp.float32)
    s = sum_ref[...]
    q = sq_ref[...]
    for j in range(lane_groups):
        blk = x[:, j * _LANE:(j + 1) * _LANE]
        s = s + blk
        q = q + blk * blk
    sum_ref[...] = s
    sq_ref[...] = q


def _affine_lrelu_kernel(x_ref, scale_ref, shift_ref, o_ref, *, slope):
    # o = LeakyReLU(x * scale + shift), scale/shift per channel (per row).
    y = x_ref[0].astype(jnp.float32) * scale_ref[...] + shift_ref[...]
    o_ref[0] = jnp.maximum(y, slope * y)       # single VPU op (slope in [0,1))


# ----------------------------------------------------------------------------
# Pallas wrappers
# ----------------------------------------------------------------------------
def _tconv_gemm_stats(x, w, k):
    """Fused ConvTranspose2d-as-GEMM + per-row BN sum / sum-of-squares.

    Returns (y bf16 (N, Cout*k*k, HWp), row_sum (ckk,), row_sq (ckk,), HW)."""
    N, Cin, H, W = x.shape
    Cout = w.shape[1]
    kk = k * k
    ckk = Cout * kk
    HW = H * W

    # torch weight (Cin, Cout, kH, kW) -> (ckk, Cin), rows ordered (co, kh, kw).
    w_t = jnp.transpose(w.reshape(Cin, ckk), (1, 0)).astype(jnp.bfloat16)
    # x stays in its NCHW-flat (N, Cin, H*W) view: no XLA transpose of x.
    x3 = x.reshape(N, Cin, HW).astype(jnp.bfloat16)

    # Optional 'parallel' row split so multi-TC chips shard the dominant kernel
    # (accumulators stay core-local); single-TC chips keep one row block.
    n_tc = _tensorcores_per_chip()
    TR = ckk
    if n_tc > 1 and ckk % (8 * n_tc) == 0:
        TR = ckk // n_tc

    # Per-lane live VMEM: 2x bf16 x-block + 2x bf16 y-block (double buffered)
    # + f32 GEMM accumulator temporary.  Fixed extras (weights, (TR,128) accs,
    # chain temporaries) stay comfortably inside the 32 MiB limit.
    bpl = 4 * Cin + 4 * TR + 4 * TR
    THW, HWp = _pick_lane_tile(HW, bpl, budget_bytes=8 << 20, max_tile=2048)
    if HWp != HW:
        # Zero columns contribute 0 to sum/sumsq (no bias inside the GEMM).
        x3 = jnp.pad(x3, ((0, 0), (0, 0), (0, HWp - HW)))

    kern = functools.partial(_tconv_stats_kernel, lane_groups=THW // _LANE)
    y, s128, q128 = pl.pallas_call(
        kern,
        out_shape=(jax.ShapeDtypeStruct((N, ckk, HWp), jnp.bfloat16),
                   jax.ShapeDtypeStruct((ckk, _LANE), jnp.float32),
                   jax.ShapeDtypeStruct((ckk, _LANE), jnp.float32)),
        grid=(ckk // TR, N, HWp // THW),
        in_specs=[
            pl.BlockSpec((TR, Cin), lambda r, n, c: (r, 0)),       # resident W
            pl.BlockSpec((1, Cin, THW), lambda r, n, c: (n, 0, c)),
        ],
        out_specs=(
            pl.BlockSpec((1, TR, THW), lambda r, n, c: (n, r, c)),  # lane-dense
            pl.BlockSpec((TR, _LANE), lambda r, n, c: (r, 0)),      # resident acc
            pl.BlockSpec((TR, _LANE), lambda r, n, c: (r, 0)),
        ),
        compiler_params=pltpu.CompilerParams(
            dimension_semantics=("parallel", "arbitrary", "arbitrary"),
            vmem_limit_bytes=_VMEM_LIMIT_BYTES),
    )(w_t, x3)

    row_sum = jnp.sum(s128, axis=1)     # single cross-lane reduce, outside Pallas
    row_sq = jnp.sum(q128, axis=1)
    return y, row_sum, row_sq, HW


def _affine_lrelu(x3, scale_c, shift_c, slope):
    """LeakyReLU(x * scale[c] + shift[c]) on a (N, C, S) array; lane-dense
    column tiles; both grid axes 'parallel' (megacore-shardable)."""
    N, C, S = x3.shape
    in_b = jnp.dtype(x3.dtype).itemsize
    bpl = C * (2 * in_b + 2 * 4 + 8)    # dbl-buffered in/out + f32 temporaries
    TC, Sp = _pick_lane_tile(S, bpl, budget_bytes=12 << 20, max_tile=4096)
    if Sp != S:
        x3 = jnp.pad(x3, ((0, 0), (0, 0), (0, Sp - S)))

    kern = functools.partial(_affine_lrelu_kernel, slope=slope)
    out = pl.pallas_call(
        kern,
        out_shape=jax.ShapeDtypeStruct((N, C, Sp), jnp.float32),
        grid=(N, Sp // TC),
        in_specs=[
            pl.BlockSpec((1, C, TC), lambda n, c: (n, 0, c)),
            pl.BlockSpec((C, 1), lambda n, c: (0, 0)),
            pl.BlockSpec((C, 1), lambda n, c: (0, 0)),
        ],
        out_specs=pl.BlockSpec((1, C, TC), lambda n, c: (n, 0, c)),
        compiler_params=pltpu.CompilerParams(
            dimension_semantics=("parallel", "parallel"),
            vmem_limit_bytes=_VMEM_LIMIT_BYTES),
    )(x3, scale_c.reshape(C, 1).astype(jnp.float32),
      shift_c.reshape(C, 1).astype(jnp.float32))
    return out[:, :, :S] if Sp != S else out


def _channel_stats(x3):
    """Per-channel (row) sum / sum-of-squares of a (N, C, S) array."""
    N, C, S = x3.shape
    bpl = C * (2 * 4 + 4)
    TC, Sp = _pick_lane_tile(S, bpl, budget_bytes=12 << 20, max_tile=4096)
    if Sp != S:
        x3 = jnp.pad(x3, ((0, 0), (0, 0), (0, Sp - S)))   # zeros: exact for sums

    kern = functools.partial(_stats_kernel, lane_groups=TC // _LANE)
    s128, q128 = pl.pallas_call(
        kern,
        out_shape=(jax.ShapeDtypeStruct((C, _LANE), jnp.float32),
                   jax.ShapeDtypeStruct((C, _LANE), jnp.float32)),
        grid=(N, Sp // TC),
        in_specs=[pl.BlockSpec((1, C, TC), lambda n, c: (n, 0, c))],
        out_specs=(pl.BlockSpec((C, _LANE), lambda n, c: (0, 0)),
                   pl.BlockSpec((C, _LANE), lambda n, c: (0, 0))),
        compiler_params=pltpu.CompilerParams(
            dimension_semantics=("arbitrary", "arbitrary"),
            vmem_limit_bytes=_VMEM_LIMIT_BYTES),
    )(x3)
    return jnp.sum(s128, axis=1), jnp.sum(q128, axis=1)


def _bn_scale_shift(ch_sum, ch_sq, count, gamma, beta, eps):
    """Training-mode (biased) BatchNorm folded to per-channel scale/shift.
    NOTE: single-pass E[x^2]-E[x]^2 variance; acceptable here because the
    tconv bias is dropped so channel means stay O(std)."""
    mean = ch_sum / count
    var = jnp.maximum(ch_sq / count - mean * mean, 0.0)
    scale = gamma * jax.lax.rsqrt(var + eps)
    shift = beta - mean * scale
    return scale, shift


# ----------------------------------------------------------------------------
# Layer forward
# ----------------------------------------------------------------------------
def cnn_transpose2d_layer_forward(x, params, mode, skip=None):
    """Forward of CNNTranspose2dLayer.  x: NCHW float32.

    params["bn_gamma"]/["bn_beta"] must match the torch BatchNorm2d
    num_features: Cout for skip=None / mode!=0, Cout + skip-channels for
    mode==0.  kernel_size / stride / negative_slope must be Python scalars."""
    k = params["kernel_size"]
    assert k == params["stride"], \
        "only kernel_size == stride, padding=0 (UNet upsample) supported"
    w = params["tconv_w"]
    gamma, beta = params["bn_gamma"], params["bn_beta"]
    eps, slope = params["bn_eps"], params["negative_slope"]
    N, _, H, W = x.shape
    Cout = w.shape[1]
    kk = k * k

    # NOTE: params["tconv_b"] is intentionally not applied -- training-mode
    # BatchNorm follows in every branch of this module and its mean subtraction
    # exactly cancels a per-channel constant added by the bias.
    y, row_sum, row_sq, HW = _tconv_gemm_stats(x, w, k)

    if skip is not None and mode == 0:
        g_main, b_main = gamma[:Cout], beta[:Cout]
    else:
        g_main, b_main = gamma, beta
    ch_sum = row_sum.reshape(Cout, kk).sum(axis=1)
    ch_sq = row_sq.reshape(Cout, kk).sum(axis=1)
    scale, shift = _bn_scale_shift(ch_sum, ch_sq, float(N * HW * kk),
                                   g_main, b_main, eps)

    # Pixel shuffle on the bf16 intermediate (half the HBM traffic of shuffling
    # the f32 result), then normalize+LeakyReLU directly into final NCHW layout
    # (no post-normalize transpose).
    Hk, Wk = H * k, W * k
    if y.shape[2] != HW:
        y = y[:, :, :HW]
    y = y.reshape(N, Cout, k, k, H, W)
    y = jnp.transpose(y, (0, 1, 4, 2, 5, 3)).reshape(N, Cout, Hk * Wk)
    # TODO(synk): folding this pixel-shuffle into the affine kernel's out_spec
    # (lane-interleaved strided stores, k=2) would remove the last extra HBM
    # round trip; kept as an XLA transpose of the bf16 tensor for robustness.

    out = _affine_lrelu(y, scale, shift, slope).reshape(N, Cout, Hk, Wk)

    if skip is None:
        return out
    if mode == 0:
        Ns, Cs, Hs, Ws = skip.shape
        s3 = skip.reshape(Ns, Cs, Hs * Ws)                 # pure reshape view
        s_sum, s_sq = _channel_stats(s3)
        s_scale, s_shift = _bn_scale_shift(s_sum, s_sq, float(Ns * Hs * Ws),
                                           gamma[Cout:], beta[Cout:], eps)
        skip_out = _affine_lrelu(s3, s_scale, s_shift, slope).reshape(skip.shape)
        return jnp.concatenate([out, skip_out], axis=1)
    return jnp.concatenate([out, skip], axis=1)
    # TODO(synk): the torch module's Print_shape debug prints are omitted.


# ----------------------------------------------------------------------------
# Pure-jnp f32 reference (keeps the tconv bias and exact f32 matmul, so the
# test also verifies the bias/BN cancellation used by the Pallas path).
# ----------------------------------------------------------------------------
def _ref_forward(x, params, mode, skip=None):
    k = params["kernel_size"]
    N, _, H, W = x.shape
    Cout = params["tconv_w"].shape[1]
    y = jnp.einsum("nchw,coyz->nohywz", x, params["tconv_w"],
                   precision=jax.lax.Precision.HIGHEST)
    y = y.reshape(N, Cout, H * k, W * k) + params["tconv_b"][None, :, None, None]

    def bn_act(t, g, b):
        mean = jnp.mean(t, axis=(0, 2, 3), keepdims=True)
        var = jnp.mean((t - mean) ** 2, axis=(0, 2, 3), keepdims=True)
        tn = (t - mean) * jax.lax.rsqrt(var + params["bn_eps"])
        tn = tn * g[None, :, None, None] + b[None, :, None, None]
        return jnp.where(tn > 0, tn, params["negative_slope"] * tn)

    g, b = params["bn_gamma"], params["bn_beta"]
    if skip is None:
        return bn_act(y, g, b)
    if mode == 0:
        return bn_act(jnp.concatenate([y, skip], axis=1), g, b)
    return jnp.concatenate([bn_act(y, g, b), skip], axis=1)


# ----------------------------------------------------------------------------
if __name__ == "__main__":
    # pars = {'tconv': dict(in_channels=4, out_channels=8, kernel_size=2, stride=2),
    #         'bn':    dict(num_features=8 or 8+Cs), 'act': dict(negative_slope=0.01)}
    N, Cin, H, W = 2, 4, 16, 16
    Cout, k, stride = 8, 2, 2
    Cs = 8                                   # skip channels
    H2, W2 = H * k, W * k

    key = jax.random.PRNGKey(0)
    kw, kb, kx, ks, kg0, kb0, kg1, kb1 = jax.random.split(key, 8)

    fan = Cin * k * k
    bound = 1.0 / np.sqrt(fan)
    base = {
        "tconv_w": jax.random.uniform(kw, (Cin, Cout, k, k), jnp.float32, -bound, bound),
        "tconv_b": jax.random.uniform(kb, (Cout,), jnp.float32, -bound, bound),
        "kernel_size": k,
        "stride": stride,
        "bn_eps": 1e-5,
        "negative_slope": 0.01,
    }
    params_cout = dict(
        base,
        bn_gamma=jax.random.uniform(kg0, (Cout,), jnp.float32, 0.5, 1.5),
        bn_beta=0.1 * jax.random.normal(kb0, (Cout,), jnp.float32))
    params_cat = dict(
        base,
        bn_gamma=jax.random.uniform(kg1, (Cout + Cs,), jnp.float32, 0.5, 1.5),
        bn_beta=0.1 * jax.random.normal(kb1, (Cout + Cs,), jnp.float32))

    x = jax.random.normal(kx, (N, Cin, H, W), jnp.float32)
    skip = jax.random.normal(ks, (N, Cs, H2, W2), jnp.float32)

    cases = [
        ("skip=None", params_cout, 0, None, (N, Cout, H2, W2)),
        ("mode=0   ", params_cat, 0, skip, (N, Cout + Cs, H2, W2)),
        ("mode=1   ", params_cout, 1, skip, (N, Cout + Cs, H2, W2)),
    ]
    # Tolerance reflects the deliberate bf16 MXU path + bf16 activation storage
    # (performance review items 1 & 6); BatchNorm statistics remain f32-exact.
    for name, p, mode, sk, expect_shape in cases:
        out = jax.block_until_ready(cnn_transpose2d_layer_forward(x, p, mode, sk))
        ref = jax.block_until_ready(_ref_forward(x, p, mode, sk))
        assert out.shape == expect_shape, (name, out.shape, expect_shape)
        out_np, ref_np = np.asarray(out), np.asarray(ref)
        np.testing.assert_allclose(out_np, ref_np, rtol=5e-2, atol=5e-2)
        assert float(np.mean(np.abs(out_np - ref_np))) < 1e-2, name

    print("KERNEL_OK")
</pallas_src>

<mosaic_0001>
module attributes {stable_mosaic.version = 11 : i64} {
  func.func @_tconv_stats_kernel(%arg0: i32, %arg1: i32, %arg2: i32, %arg3: memref<32x4xbf16, #tpu.memory_space<vmem>>, %arg4: memref<1x4x256xbf16, #tpu.memory_space<vmem>>, %arg5: memref<1x32x256xbf16, #tpu.memory_space<vmem>>, %arg6: memref<32x128xf32, #tpu.memory_space<vmem>>, %arg7: memref<32x128xf32, #tpu.memory_space<vmem>>) attributes {dimension_semantics = [#tpu.dimension_semantics<parallel>, #tpu.dimension_semantics<arbitrary>, #tpu.dimension_semantics<arbitrary>], iteration_bounds = array<i64: 1, 2, 1>, scalar_prefetch = 0 : i64, scratch_operands = 0 : i64, tpu.core_type = #tpu.core_type<tc>, window_params = [{transform_indices = @transform_0, window_bounds = array<i64: 32, 4>}, {transform_indices = @transform_1, window_bounds = array<i64: 1, 4, 256>}, {transform_indices = @transform_2, window_bounds = array<i64: 1, 32, 256>}, {transform_indices = @transform_3, window_bounds = array<i64: 32, 128>}, {transform_indices = @transform_4, window_bounds = array<i64: 32, 128>}]} {
    %c0 = arith.constant 0 : index
    %c0_0 = arith.constant 0 : index
    %0 = vector.load %arg3[%c0, %c0_0] : memref<32x4xbf16, #tpu.memory_space<vmem>>, vector<32x4xbf16>
    %c0_1 = arith.constant 0 : index
    %c0_2 = arith.constant 0 : index
    %c0_3 = arith.constant 0 : index
    %1 = vector.load %arg4[%c0_1, %c0_2, %c0_3] : memref<1x4x256xbf16, #tpu.memory_space<vmem>>, vector<1x4x256xbf16>
    %2 = vector.shape_cast %1 : vector<1x4x256xbf16> to vector<4x256xbf16>
    %cst = arith.constant dense<0.000000e+00> : vector<32x256xf32>
    %3 = tpu.matmul %0, %2, %cst {dimension_numbers = #tpu.dot_dimension_numbers<[1], [0], [0], [1], [0, 0, 1, 1], [], []>} : vector<32x4xbf16>, vector<4x256xbf16>, vector<32x256xf32> -> vector<32x256xf32>
    %4 = arith.truncf %3 : vector<32x256xf32> to vector<32x256xbf16>
    %c0_4 = arith.constant 0 : index
    %c0_5 = arith.constant 0 : index
    %c0_6 = arith.constant 0 : index
    %5 = vector.load %arg5[%c0_4, %c0_5, %c0_6] : memref<1x32x256xbf16, #tpu.memory_space<vmem>>, vector<1x32x256xbf16>
    %6 = vector.shape_cast %5 : vector<1x32x256xbf16> to vector<32x256xbf16>
    %7 = vector.shape_cast %4 : vector<32x256xbf16> to vector<1x32x256xbf16>
    tpu.vector_store %arg5[%c0_4, %c0_5, %c0_6], %7 {strides = array<i32>} : memref<1x32x256xbf16, #tpu.memory_space<vmem>>, vector<1x32x256xbf16>,
    %c0_i32 = arith.constant 0 : i32
    %8 = arith.cmpi eq, %arg1, %c0_i32 : i32
    %c0_i32_7 = arith.constant 0 : i32
    %9 = arith.cmpi eq, %arg2, %c0_i32_7 : i32
    %10 = arith.andi %8, %9 : i1
    %11 = arith.extui %10 : i1 to i32
    %c0_i32_8 = arith.constant 0 : i32
    %12 = arith.cmpi ne, %11, %c0_i32_8 : i32
    scf.if %12 {
      %cst_17 = arith.constant 0.000000e+00 : f32
      %25 = vector.broadcast %cst_17 : f32 to vector<32x128xf32>
      %c0_18 = arith.constant 0 : index
      %c0_19 = arith.constant 0 : index
      %26 = vector.load %arg6[%c0_18, %c0_19] : memref<32x128xf32, #tpu.memory_space<vmem>>, vector<32x128xf32>
      tpu.vector_store %arg6[%c0_18, %c0_19], %25 {strides = array<i32>} : memref<32x128xf32, #tpu.memory_space<vmem>>, vector<32x128xf32>,
      %cst_20 = arith.constant 0.000000e+00 : f32
      %27 = vector.broadcast %cst_20 : f32 to vector<32x128xf32>
      %c0_21 = arith.constant 0 : index
      %c0_22 = arith.constant 0 : index
      %28 = vector.load %arg7[%c0_21, %c0_22] : memref<32x128xf32, #tpu.memory_space<vmem>>, vector<32x128xf32>
      tpu.vector_store %arg7[%c0_21, %c0_22], %27 {strides = array<i32>} : memref<32x128xf32, #tpu.memory_space<vmem>>, vector<32x128xf32>,
    } else {
    }
    %c0_9 = arith.constant 0 : index
    %c0_10 = arith.constant 0 : index
    %13 = vector.load %arg6[%c0_9, %c0_10] : memref<32x128xf32, #tpu.memory_space<vmem>>, vector<32x128xf32>
    %c0_11 = arith.constant 0 : index
    %c0_12 = arith.constant 0 : index
    %14 = vector.load %arg7[%c0_11, %c0_12] : memref<32x128xf32, #tpu.memory_space<vmem>>, vector<32x128xf32>
    %15 = vector.extract_strided_slice %3 {offsets = [0, 0], sizes = [32, 128], strides = [1, 1]} : vector<32x256xf32> to vector<32x128xf32>
    %16 = arith.addf %13, %15 : vector<32x128xf32>
    %17 = arith.mulf %15, %15 : vector<32x128xf32>
    %18 = arith.addf %14, %17 : vector<32x128xf32>
    %19 = vector.extract_strided_slice %3 {offsets = [0, 128], sizes = [32, 128], strides = [1, 1]} : vector<32x256xf32> to vector<32x128xf32>
    %20 = arith.addf %16, %19 : vector<32x128xf32>
    %21 = arith.mulf %19, %19 : vector<32x128xf32>
    %22 = arith.addf %18, %21 : vector<32x128xf32>
    %c0_13 = arith.constant 0 : index
    %c0_14 = arith.constant 0 : index
    %23 = vector.load %arg6[%c0_13, %c0_14] : memref<32x128xf32, #tpu.memory_space<vmem>>, vector<32x128xf32>
    tpu.vector_store %arg6[%c0_13, %c0_14], %20 {strides = array<i32>} : memref<32x128xf32, #tpu.memory_space<vmem>>, vector<32x128xf32>,
    %c0_15 = arith.constant 0 : index
    %c0_16 = arith.constant 0 : index
    %24 = vector.load %arg7[%c0_15, %c0_16] : memref<32x128xf32, #tpu.memory_space<vmem>>, vector<32x128xf32>
    tpu.vector_store %arg7[%c0_15, %c0_16], %22 {strides = array<i32>} : memref<32x128xf32, #tpu.memory_space<vmem>>, vector<32x128xf32>,
    return
  }
  func.func @transform_0(%arg0: i32, %arg1: i32, %arg2: i32) -> (i32, i32) {
    %c0_i32 = arith.constant 0 : i32
    %c0_i32_0 = arith.constant 0 : i32
    return %arg0, %c0_i32 : i32, i32
  }
  func.func @transform_1(%arg0: i32, %arg1: i32, %arg2: i32) -> (i32, i32, i32) {
    %c0_i32 = arith.constant 0 : i32
    %c0_i32_0 = arith.constant 0 : i32
    return %arg1, %c0_i32, %arg2 : i32, i32, i32
  }
  func.func @transform_2(%arg0: i32, %arg1: i32, %arg2: i32) -> (i32, i32, i32) {
    %c0_i32 = arith.constant 0 : i32
    return %arg1, %arg0, %arg2 : i32, i32, i32
  }
  func.func @transform_3(%arg0: i32, %arg1: i32, %arg2: i32) -> (i32, i32) {
    %c0_i32 = arith.constant 0 : i32
    %c0_i32_0 = arith.constant 0 : i32
    return %arg0, %c0_i32 : i32, i32
  }
  func.func @transform_4(%arg0: i32, %arg1: i32, %arg2: i32) -> (i32, i32) {
    %c0_i32 = arith.constant 0 : i32
    %c0_i32_0 = arith.constant 0 : i32
    return %arg0, %c0_i32 : i32, i32
  }
}

</mosaic_0001>

<llo_original>
// kernel: tpu_custom_call.1
$region0: #{tpu_custom_call.1}
  #allocation0 [shape = 'u32[]', space=smem, size = 0x4, offset = 0x4, fixed_abs, tag = 'smem constant byte address 0x4 - core index']
  #allocation1 [shape = 'u32[144,128]{1,0:T(1,128)}', space=vmem, size = 0x12000, scoped, tag = 'internal scratch']
  %s0 = inlined_call_operand.vmem [shape: bf16[32,4], index: 0, kind: input, shape index: {}]
  %s1 = inlined_call_operand.vmem [shape: bf16[2,4,256], index: 1, kind: input, shape index: {}]
  %s2 = inlined_call_operand.hbm [shape: bf16[2,32,256], index: 2, kind: output, shape index: {0}]
  %s3 = inlined_call_operand.hbm [shape: f32[32,128], index: 3, kind: output, shape index: {1}]
  %s4 = inlined_call_operand.hbm [shape: f32[32,128], index: 4, kind: output, shape index: {2}]
  %5 = xla_tuple %s2, %s3, %s4
  %s6 = sld [smem:[#allocation0]]
  $region61: #{tpu_custom_call.1} parent=0
    _
  %s8 = ssub.s32 1, %s6
  %s9 = scalar_select 0, %s8, %s6
  $region1: #{tpu_custom_call.1} parent=0
    #allocation2 [shape = 'u8[32768]{0}', space=vmem, size = 0x8000, scoped, tag = 'output window, operand 0']
    #allocation3 [shape = 's32[2]{0}', space=sflag, size = 0x8, scoped, tag = 'scoped memory for tpu_custom_call.1']
    #allocation4 [shape = 'u8[16384]{0}', space=vmem, size = 0x4000, scoped, tag = 'output window, operand 1, single buffered']
    #allocation5 [shape = 's32[1]{0}', space=sflag, size = 0x4, scoped, tag = 'scoped memory for tpu_custom_call.1']
    #allocation6 [shape = 'u8[16384]{0}', space=vmem, size = 0x4000, scoped, tag = 'output window, operand 2, single buffered']
    %10 = vsyncpa [#allocation3], 0
    %s11 = scalar_lea.sflag [#allocation3], 1
    %12 = vsyncpa %s11, 0
    %13 = vsyncpa [#allocation5], 0
    loop: start=0, step=1, limit=4
    $region2: #{tpu_custom_call.1} parent=1 // loop_pre_header
      _
    $region3: #{tpu_custom_call.1} parent=1 // loop_header
      %s15 = sphi 0, %s19
      %p16 = scmp.ge.s32.totalorder %s15, 4
      %s22 = sphi 0, %s41
      %s23 = sphi 0, %s37
      %s24 = sphi 0, %s33
      %s25 = sphi 0, %s22
      %s26 = sphi 0, %s23
      %s27 = sphi 0, %s24
      %s28 = sphi 0, %s25
      %s29 = sphi 0, %s26
      %s30 = sphi 0, %s27
      %s44 = sphi 0, %s46
      %s47 = sphi 0, %s44
      %s48 = sphi 0, %s47
      %s64 = sphi 0, %s48
      %s72 = sphi 0, %s74
      %s75 = sphi 0, %s72
      %s76 = sphi 0, %s75
      %s92 = sphi 0, %s76
      %s102 = sphi 0, %s104
      %s105 = sphi 0, %s102
      %s106 = sphi 0, %s105
      %s122 = sphi 0, %s106
      %s128 = sphi 0, %s130
      %s131 = sphi 0, %s128
      %s132 = sphi 0, %s131
      %s148 = sphi 0, %s132
      %s154 = sphi 0, %s156
      %s157 = sphi 0, %s154
      %s158 = sphi 0, %s157
      %s174 = sphi 0, %s158
    $region4: #{tpu_custom_call.1} parent=1 // loop_header_branch
      %18 = sbr.rel (%p16) target = $region8
    $region5: #{tpu_custom_call.1} parent=1 // loop_body
      %s20 = ssub.s32 %s15, 1
      %s21 = ssub.s32 %s15, 2
      %s31 = sadd.s32 1, %s24
      %p32 = scmp.ge.s32.totalorder %s31, 1
      %s33 = scalar_select %p32, 0, %s31
      %s34 = sadd.s32 1, %s23
      %s35 = scalar_select %p32, %s34, %s23
      %p36 = scmp.ge.s32.totalorder %s35, 2
      %s37 = scalar_select %p36, 0, %s35
      %s38 = sadd.s32 1, %s22
      %s39 = scalar_select %p36, %s38, %s22
      %p40 = scmp.ge.s32.totalorder %s39, 1
      %s41 = scalar_select %p40, 0, %s39
      %s42 = ssub.s32 %s22, %s41
      %p43 = scmp.eq.s32.totalorder %s42, 0
      %s45 = sadd.s32 %s44, 1
      %s46 = scalar_select %p43, %s44, %s45
      %p49 = pneg %p43
      %p50 = scmp.eq.s32.totalorder %s15, 1
      %p51 = por %p49, %p50
      %p52 = scmp.ne.s32.totalorder %s44, %s47
      %p53 = scmp.eq.s32.totalorder %s15, 0
      %p54 = por %p52, %p53
      %p55 = scmp.ne.s32.totalorder %s44, %s47
      %p56 = scmp.eq.s32.totalorder %s20, 1
      %p57 = por %p55, %p56
      %p58 = scmp.ne.s32.totalorder %s47, %s48
      %p59 = scmp.eq.s32.totalorder %s20, 0
      %p60 = por %p58, %p59
      %p61 = scmp.ne.s32.totalorder %s47, %s48
      %p62 = scmp.eq.s32.totalorder %s21, 1
      %p63 = por %p61, %p62
      %p65 = scmp.ne.s32.totalorder %s48, %s64
      %p66 = scmp.eq.s32.totalorder %s21, 0
      %p67 = por %p65, %p66
      %s68 = ssub.s32 %s23, %s37
      %s69 = ssub.s32 %s24, %s33
      %s70 = sor.u32 %s68, %s69
      %p71 = scmp.eq.s32.totalorder %s70, 0
      %s73 = sadd.s32 %s72, 1
      %s74 = scalar_select %p71, %s72, %s73
      %p77 = pneg %p71
      %p78 = scmp.eq.s32.totalorder %s15, 1
      %p79 = por %p77, %p78
      %p80 = scmp.ne.s32.totalorder %s72, %s75
      %p81 = scmp.eq.s32.totalorder %s15, 0
      %p82 = por %p80, %p81
      %p83 = scmp.ne.s32.totalorder %s72, %s75
      %p84 = scmp.eq.s32.totalorder %s20, 1
      %p85 = por %p83, %p84
      %p86 = scmp.ne.s32.totalorder %s75, %s76
      %p87 = scmp.eq.s32.totalorder %s20, 0
      %p88 = por %p86, %p87
      %p89 = scmp.ne.s32.totalorder %s75, %s76
      %p90 = scmp.eq.s32.totalorder %s21, 1
      %p91 = por %p89, %p90
      %p93 = scmp.ne.s32.totalorder %s76, %s92
      %p94 = scmp.eq.s32.totalorder %s21, 0
      %p95 = por %p93, %p94
      %s96 = ssub.s32 %s23, %s37
      %s97 = ssub.s32 %s22, %s41
      %s98 = sor.u32 %s96, %s97
      %s99 = ssub.s32 %s24, %s33
      %s100 = sor.u32 %s98, %s99
      %p101 = scmp.eq.s32.totalorder %s100, 0
      %s103 = sadd.s32 %s102, 1
      %s104 = scalar_select %p101, %s102, %s103
      %p107 = pneg %p101
      %p108 = scmp.eq.s32.totalorder %s15, 1
      %p109 = por %p107, %p108
      %p110 = scmp.ne.s32.totalorder %s102, %s105
      %p111 = scmp.eq.s32.totalorder %s15, 0
      %p112 = por %p110, %p111
      %p113 = scmp.ne.s32.totalorder %s102, %s105
      %p114 = scmp.eq.s32.totalorder %s20, 1
      %p115 = por %p113, %p114
      %p116 = scmp.ne.s32.totalorder %s105, %s106
      %p117 = scmp.eq.s32.totalorder %s20, 0
      %p118 = por %p116, %p117
      %p119 = scmp.ne.s32.totalorder %s105, %s106
      %p120 = scmp.eq.s32.totalorder %s21, 1
      %p121 = por %p119, %p120
      %p123 = scmp.ne.s32.totalorder %s106, %s122
      %p124 = scmp.eq.s32.totalorder %s21, 0
      %p125 = por %p123, %p124
      %s126 = ssub.s32 %s22, %s41
      %p127 = scmp.eq.s32.totalorder %s126, 0
      %s129 = sadd.s32 %s128, 1
      %s130 = scalar_select %p127, %s128, %s129
      %p133 = pneg %p127
      %p134 = scmp.eq.s32.totalorder %s15, 1
      %p135 = por %p133, %p134
      %p136 = scmp.ne.s32.totalorder %s128, %s131
      %p137 = scmp.eq.s32.totalorder %s15, 0
      %p138 = por %p136, %p137
      %p139 = scmp.ne.s32.totalorder %s128, %s131
      %p140 = scmp.eq.s32.totalorder %s20, 1
      %p141 = por %p139, %p140
      %p142 = scmp.ne.s32.totalorder %s131, %s132
      %p143 = scmp.eq.s32.totalorder %s20, 0
      %p144 = por %p142, %p143
      %p145 = scmp.ne.s32.totalorder %s131, %s132
      %p146 = scmp.eq.s32.totalorder %s21, 1
      %p147 = por %p145, %p146
      %p149 = scmp.ne.s32.totalorder %s132, %s148
      %p150 = scmp.eq.s32.totalorder %s21, 0
      %p151 = por %p149, %p150
      %s152 = ssub.s32 %s22, %s41
      %p153 = scmp.eq.s32.totalorder %s152, 0
      %s155 = sadd.s32 %s154, 1
      %s156 = scalar_select %p153, %s154, %s155
      %p159 = pneg %p153
      %p160 = scmp.eq.s32.totalorder %s15, 1
      %p161 = por %p159, %p160
      %p162 = scmp.ne.s32.totalorder %s154, %s157
      %p163 = scmp.eq.s32.totalorder %s15, 0
      %p164 = por %p162, %p163
      %p165 = scmp.ne.s32.totalorder %s154, %s157
      %p166 = scmp.eq.s32.totalorder %s20, 1
      %p167 = por %p165, %p166
      %p168 = scmp.ne.s32.totalorder %s157, %s158
      %p169 = scmp.eq.s32.totalorder %s20, 0
      %p170 = por %p168, %p169
      %p171 = scmp.ne.s32.totalorder %s157, %s158
      %p172 = scmp.eq.s32.totalorder %s21, 1
      %p173 = por %p171, %p172
      %p175 = scmp.ne.s32.totalorder %s158, %s174
      %p176 = scmp.eq.s32.totalorder %s21, 0
      %p177 = por %p175, %p176
      %p178 = scmp.le.s32.totalorder 1, %s15
      %p179 = scmp.lt.s32.totalorder %s15, 3
      %p180 = pnand %p178, %p179
      %p181 = pneg %p180
      // Predicated region
      $region9: #{tpu_custom_call.1} parent=5 // pred_check
        _
      $region10: #{tpu_custom_call.1} parent=5 // pred_check_branch
        %183 = sbr.rel (%p180) target = $region12
      $region11: #{tpu_custom_call.1} parent=5 // pred_region
        %s184 = ssub.s32 %s15, 1
        // Predicated region
        $region13: #{tpu_custom_call.1} parent=11 // pred_check
          %p185 = pneg %p60
        $region14: #{tpu_custom_call.1} parent=11 // pred_check_branch
          %187 = sbr.rel (%p185) target = $region16
        $region15: #{tpu_custom_call.1} parent=11 // pred_region
          %s188 = smul.u32 4, %s25
          %p189 = scmp.lt.s32.totalorder %s188, 3
          %s190 = scalar_select %p189, %s188, 3
          %s191 = smul.addr %s190, 4
          %s192 = scalar_lea.vmem %s0, %s191
          %s193 = smul.u32 4, %s25
        $region16: #{tpu_custom_call.1} parent=11 // pred_fallthru
          _
      $region12: #{tpu_custom_call.1} parent=5 // pred_fallthru
        _
      %p194 = scmp.lt.s32.totalorder %s15, 2
      // Predicated region
      $region17: #{tpu_custom_call.1} parent=5 // pred_check
        %p195 = pneg %p194
      $region18: #{tpu_custom_call.1} parent=5 // pred_check_branch
        %197 = sbr.rel (%p195) target = $region20
      $region19: #{tpu_custom_call.1} parent=5 // pred_region
        // Predicated region
        $region21: #{tpu_custom_call.1} parent=19 // pred_check
          %p198 = pneg %p82
        $region22: #{tpu_custom_call.1} parent=19 // pred_check_branch
          %200 = sbr.rel (%p198) target = $region24
        $region23: #{tpu_custom_call.1} parent=19 // pred_region
          %s201 = smul.u32 2, %s24
          %p202 = scmp.lt.s32.totalorder %s23, 1
          %s203 = scalar_select %p202, %s23, 1
          %p204 = scmp.lt.s32.totalorder %s201, 1
          %s205 = scalar_select %p204, %s201, 1
          %s206 = smul.addr %s203, 2
          %s207 = sadd.s32 %s205, %s206
          %s208 = smul.addr %s207, 2
          %s209 = scalar_lea.vmem %s1, %s208
          %s210 = smul.u32 2, %s24
        $region24: #{tpu_custom_call.1} parent=19 // pred_fallthru
          _
      $region20: #{tpu_custom_call.1} parent=5 // pred_fallthru
        _
      %p211 = scmp.le.s32.totalorder 1, %s15
      %p212 = scmp.lt.s32.totalorder %s15, 3
      %p213 = pnand %p211, %p212
      %p214 = pneg %p213
      // Predicated region
      $region25: #{tpu_custom_call.1} parent=5 // pred_check
        _
      $region26: #{tpu_custom_call.1} parent=5 // pred_check_branch
        %216 = sbr.rel (%p213) target = $region28
      $region27: #{tpu_custom_call.1} parent=5 // pred_region
        %s217 = ssub.s32 %s15, 1
        %s218 = smul.u32 4, %s25
        %p219 = scmp.lt.s32.totalorder %s218, 3
        %s220 = scalar_select %p219, %s218, 3
        %s221 = smul.addr %s220, 4
        %s222 = scalar_lea.vmem %s0, %s221
        %p223 = pneg %p60
        %p224 = pneg %p57
        %s225 = smul.u32 2, %s27
        %p226 = scmp.lt.s32.totalorder %s26, 1
        %s227 = scalar_select %p226, %s26, 1
        %p228 = scmp.lt.s32.totalorder %s225, 1
        %s229 = scalar_select %p228, %s225, 1
        %s230 = smul.addr %s227, 2
        %s231 = sadd.s32 %s229, %s230
        %s232 = smul.addr %s231, 2
        %s233 = scalar_lea.vmem %s1, %s232
        %p234 = pneg %p88
        %p235 = pneg %p85
        %p236 = pneg %p118
        %p237 = pneg %p115
        %s238 = sand.u32 %s105, 1
        %s239 = scalar_lea.sflag [#allocation3], %s238
        %s240 = sand.u32 %s105, 1
        %s241 = smul.addr %s240, 32
        %s242 = scalar_lea.vmem [#allocation2], %s241
        %p243 = pneg %p144
        %p244 = pneg %p141
        %p245 = pneg %p170
        %p246 = pneg %p167
        %s247 = smul.u32 4, %s25
        %p248 = scmp.lt.s32.totalorder %s247, 3
        %s249 = scalar_select %p248, %s247, 3
        %s250 = smul.addr %s249, 4
        %s251 = scalar_lea.vmem %s0, %s250
        %s252 = smul.u32 4, %s25
        %s253 = smul.u32 2, %s27
        %p254 = scmp.lt.s32.totalorder %s26, 1
        %s255 = scalar_select %p254, %s26, 1
        %p256 = scmp.lt.s32.totalorder %s253, 1
        %s257 = scalar_select %p256, %s253, 1
        %s258 = smul.addr %s255, 2
        %s259 = sadd.s32 %s257, %s258
        %s260 = smul.addr %s259, 2
        %s261 = scalar_lea.vmem %s1, %s260
        %s262 = smul.u32 2, %s27
        %s263 = smul.u32 4, %s25
        %s264 = smul.u32 2, %s27
        %s265 = smul.u32 4, %s25
        %s266 = smul.u32 4, %s25
        %v268 = vld [vmem:[%s251] sm:$0xf]
        %v269 = vld [vmem:[%s251 + $0x4] sm:$0xf]
        %v270 = vld [vmem:[%s251 + $0x8] sm:$0xf]
        %v271 = vld [vmem:[%s251 + $0xc] sm:$0xf]
        %v272 = vld [vmem:[%s261] sm:$0xf]
        %v277 = vunpack.c.l.b16 %v268
        %v278 = vunpack.c.l.b16 %v269
        %v279 = vunpack.c.l.b16 %v270
        %v280 = vunpack.c.l.b16 %v271
        %v281 = vpack.c.b16 %v278, %v277
        %v282 = vpack.c.b16 %v280, %v279
        %v285 = vunpack.c.l.s4 1983009808
        %v286 = vunpack.c.0.s8 %v285
        %v287 = vlaneseq
        %v288 = vshrl.u32 %v287, 7
        %v289 = vsub.s32 %v286, %v288
        %v290 = vrot.slane %v272, %v289
        %v291 = vcombine.high %v290, %v290
        %vm292 = vcmask 31744
        %v294 = vsel %vm292, %v281, 0
        %v297 = vsel %vm292, %v282, 0
        %vm299 = vcmask 1041408
        %v301 = vsel %vm299, %v290, 0
        %v304 = vsel %vm299, %v291, 0
        %306 = vmatprep.subr.bf16.mxu0 %v304
        %307 = vmatpush1.bf16.msra.mxu0 %v301
        %308 = vmatprep.subr.bf16.mxu0 0
        %309 = vmatpush1.bf16.msra.mxu0 0
        %310 = vmatprep.subr.bf16.mxu0 0
        %311 = vmatpush1.bf16.msra.mxu0 0
        %312 = vmatprep.subr.bf16.mxu0 0
        %313 = vmatpush1.bf16.msra.mxu0 0
        %314 = vmatprep.subr.bf16.mxu0 0
        %315 = vmatpush1.bf16.msra.mxu0 0
        %316 = vmatprep.subr.bf16.mxu0 0
        %317 = vmatpush1.bf16.msra.mxu0 0
        %318 = vmatprep.subr.bf16.mxu0 0
        %319 = vmatpush1.bf16.msra.mxu0 0
        %320 = vmatprep.subr.bf16.mxu0 0
        %321 = vmatpush1.bf16.msra.mxu0 0
        %322 = vmatprep.subr.bf16.mxu0 0
        %323 = vmatpush1.bf16.msra.mxu0 0
        %324 = vmatprep.subr.bf16.mxu0 0
        %325 = vmatpush1.bf16.msra.mxu0 0
        %326 = vmatprep.subr.bf16.mxu0 0
        %327 = vmatpush1.bf16.msra.mxu0 0
        %328 = vmatprep.subr.bf16.mxu0 0
        %329 = vmatpush1.bf16.msra.mxu0 0
        %330 = vmatprep.subr.bf16.mxu0 0
        %331 = vmatpush1.bf16.msra.mxu0 0
        %332 = vmatprep.subr.bf16.mxu0 0
        %333 = vmatpush1.bf16.msra.mxu0 0
        %334 = vmatprep.subr.bf16.mxu0 0
        %335 = vmatpush1.bf16.msra.mxu0 0
        %336 = vmatprep.subr.bf16.mxu0 0
        %337 = vmatpush1.bf16.msra.mxu0 0
        %338 = vmatprep.mubr.bf16.mxu0 0
        %339 = vmatmul.mubr.bf16.gmra.mrb[0].mxu0 %v294
        %v340 = vpop.f32.mrb[0].mxu0
        %v341 = vadd.f32 0.0, %v340
        %v342 = vpop.f32.mrb[0].mxu0
        %v343 = vadd.f32 0.0, %v342
        %v344 = vpop.f32.mrb[0].mxu0
        %v345 = vadd.f32 0.0, %v344
        %v346 = vpop.f32.mrb[0].mxu0
        %v347 = vadd.f32 0.0, %v346
        %348 = vmatprep.mubr.bf16.mxu0 0
        %349 = vmatmul.mubr.bf16.gmra.mrb[0].mxu0 %v297
        %v350 = vpop.f32.mrb[0].mxu0
        %v351 = vadd.f32 0.0, %v350
        %v352 = vpop.f32.mrb[0].mxu0
        %v353 = vadd.f32 0.0, %v352
        %v354 = vpop.f32.mrb[0].mxu0
        %v355 = vadd.f32 0.0, %v354
        %v356 = vpop.f32.mrb[0].mxu0
        %v357 = vadd.f32 0.0, %v356
        %358 = vdwg.mxu0
        %v359 = vpack.c.bf16 %v345, %v341
        %v360 = vpack.c.bf16 %v347, %v343
        %v361 = vpack.c.bf16 %v355, %v351
        %v362 = vpack.c.bf16 %v357, %v353
        %v367 = vunpack.c.l.b16 %v359
        %v368 = vunpack.c.l.b16 %v360
        %v369 = vunpack.c.h.b16 %v359
        %v370 = vunpack.c.h.b16 %v360
        %v371 = vunpack.c.l.b16 %v361
        %v372 = vunpack.c.l.b16 %v362
        %v373 = vunpack.c.h.b16 %v361
        %v374 = vunpack.c.h.b16 %v362
        %v375 = vpack.c.b16 %v368, %v367
        %v376 = vpack.c.b16 %v370, %v369
        %v377 = vpack.c.b16 %v372, %v371
        %v378 = vpack.c.b16 %v374, %v373
        %383 = vst [vmem:[%s242] sm:$0xff] %v375
        %384 = vst [vmem:[%s242 + $0x8] sm:$0xff] %v376
        %385 = vst [vmem:[%s242 + $0x10] sm:$0xff] %v377
        %386 = vst [vmem:[%s242 + $0x18] sm:$0xff] %v378
        %p387 = scmp.eq.s32.totalorder %s26, 0
        %p388 = scmp.eq.s32.totalorder %s27, 0
        %p389 = pnand %p387, %p388
        %p390 = pneg %p389
        // Predicated region
        $region29: #{tpu_custom_call.1} parent=27 // pred_check
          _
        $region30: #{tpu_custom_call.1} parent=27 // pred_check_branch
          %392 = sbr.rel (%p389) target = $region32
        $region31: #{tpu_custom_call.1} parent=27 // pred_region
          %393 = vst [vmem:[#allocation4] sm:$0xff] 0.0
          %394 = vst [vmem:[#allocation4 + $0x8] sm:$0xff] 0.0
          %395 = vst [vmem:[#allocation4 + $0x10] sm:$0xff] 0.0
          %396 = vst [vmem:[#allocation4 + $0x18] sm:$0xff] 0.0
          %397 = vst [vmem:[#allocation6] sm:$0xff] 0.0
          %398 = vst [vmem:[#allocation6 + $0x8] sm:$0xff] 0.0
          %399 = vst [vmem:[#allocation6 + $0x10] sm:$0xff] 0.0
          %400 = vst [vmem:[#allocation6 + $0x18] sm:$0xff] 0.0
        $region32: #{tpu_custom_call.1} parent=27 // pred_fallthru
          _
        %v401 = vld [vmem:[#allocation4] sm:$0xff]
        %v402 = vld [vmem:[#allocation4 + $0x8] sm:$0xff]
        %v403 = vld [vmem:[#allocation4 + $0x10] sm:$0xff]
        %v404 = vld [vmem:[#allocation4 + $0x18] sm:$0xff]
        %v405 = vld [vmem:[#allocation6] sm:$0xff]
        %v406 = vld [vmem:[#allocation6 + $0x8] sm:$0xff]
        %v407 = vld [vmem:[#allocation6 + $0x10] sm:$0xff]
        %v408 = vld [vmem:[#allocation6 + $0x18] sm:$0xff]
        %v409 = vadd.f32 %v401, %v341
        %v410 = vadd.f32 %v402, %v345
        %v411 = vadd.f32 %v403, %v351
        %v412 = vadd.f32 %v404, %v355
        %v413 = vmul.f32 %v341, %v341
        %v414 = vmul.f32 %v345, %v345
        %v415 = vmul.f32 %v351, %v351
        %v416 = vmul.f32 %v355, %v355
        %v417 = vadd.f32 %v405, %v413
        %v418 = vadd.f32 %v406, %v414
        %v419 = vadd.f32 %v407, %v415
        %v420 = vadd.f32 %v408, %v416
        %v421 = vadd.f32 %v409, %v343
        %v422 = vadd.f32 %v410, %v347
        %v423 = vadd.f32 %v411, %v353
        %v424 = vadd.f32 %v412, %v357
        %v425 = vmul.f32 %v343, %v343
        %v426 = vmul.f32 %v347, %v347
        %v427 = vmul.f32 %v353, %v353
        %v428 = vmul.f32 %v357, %v357
        %v429 = vadd.f32 %v417, %v425
        %v430 = vadd.f32 %v418, %v426
        %v431 = vadd.f32 %v419, %v427
        %v432 = vadd.f32 %v420, %v428
        %433 = vst [vmem:[#allocation4] sm:$0xff] %v421
        %434 = vst [vmem:[#allocation4 + $0x8] sm:$0xff] %v422
        %435 = vst [vmem:[#allocation4 + $0x10] sm:$0xff] %v423
        %436 = vst [vmem:[#allocation4 + $0x18] sm:$0xff] %v424
        %437 = vst [vmem:[#allocation6] sm:$0xff] %v429
        %438 = vst [vmem:[#allocation6 + $0x8] sm:$0xff] %v430
        %439 = vst [vmem:[#allocation6 + $0x10] sm:$0xff] %v431
        %440 = vst [vmem:[#allocation6 + $0x18] sm:$0xff] %v432
        %s441 = sand.u32 %s105, 1
        %s442 = scalar_lea.sflag [#allocation3], %s441
        %s443 = sand.u32 %s105, 1
        %s444 = smul.addr %s443, 32
        %s445 = scalar_lea.vmem [#allocation2], %s444
        // Predicated region
        $region33: #{tpu_custom_call.1} parent=27 // pred_check
          %p446 = pneg %p115
        $region34: #{tpu_custom_call.1} parent=27 // pred_check_branch
          %448 = sbr.rel (%p446) target = $region36
        $region35: #{tpu_custom_call.1} parent=27 // pred_region
          %s449 = smul.u32 4, %s25
          %s450 = smul.u32 2, %s27
          %s452 = ssub.s32 512, 512
          %453 = vsyncadd %s442, %s452
          %s454 = smul.addr %s449, 2
          %s455 = sadd.s32 %s450, %s454
          %s456 = smul.addr %s26, 8
          %s457 = sadd.s32 %s455, %s456
          %s458 = smul.addr %s457, 64
          %s459 = scalar_lea.hbm %s2, %s458
          %s460 = sshll.u32 %s445, 4
          %s461 = int_to_ptr.vmem [resolvable:$true] %s460
          %466 = dma.vmem_to_hbm [thread:$0]  %s461, 512, %s459, %s442, 128, 128, 8
        $region36: #{tpu_custom_call.1} parent=27 // pred_fallthru
          _
        // Predicated region
        $region37: #{tpu_custom_call.1} parent=27 // pred_check
          %p467 = pneg %p141
        $region38: #{tpu_custom_call.1} parent=27 // pred_check_branch
          %469 = sbr.rel (%p467) target = $region40
        $region39: #{tpu_custom_call.1} parent=27 // pred_region
          %s470 = smul.u32 4, %s25
          %s472 = ssub.s32 512, 512
          %473 = vsyncadd [#allocation5], %s472
          %s474 = smul.addr %s470, 128
          %s475 = scalar_lea.hbm %s3, %s474
          %s476 = sshll.u32 [#allocation4], 4
          %s477 = int_to_ptr.vmem [resolvable:$true] %s476
          %482 = dma.vmem_to_hbm [thread:$0]  %s477, 512, %s475, [#allocation5], 128, 128, 8
        $region40: #{tpu_custom_call.1} parent=27 // pred_fallthru
          _
        // Predicated region
        $region41: #{tpu_custom_call.1} parent=27 // pred_check
          %p483 = pneg %p167
        $region42: #{tpu_custom_call.1} parent=27 // pred_check_branch
          %485 = sbr.rel (%p483) target = $region44
        $region43: #{tpu_custom_call.1} parent=27 // pred_region
          %s486 = smul.u32 4, %s25
          %s488 = ssub.s32 512, 512
          %489 = vsyncadd [#allocation5], %s488
          %s490 = smul.addr %s486, 128
          %s491 = scalar_lea.hbm %s4, %s490
          %s492 = sshll.u32 [#allocation6], 4
          %s493 = int_to_ptr.vmem [resolvable:$true] %s492
          %498 = dma.vmem_to_hbm [thread:$0]  %s493, 512, %s491, [#allocation5], 128, 128, 8
        $region44: #{tpu_custom_call.1} parent=27 // pred_fallthru
          _
        // Predicated region
        $region45: #{tpu_custom_call.1} parent=27 // pred_check
          %p499 = pneg %p141
        $region46: #{tpu_custom_call.1} parent=27 // pred_check_branch
          %501 = sbr.rel (%p499) target = $region48
        $region47: #{tpu_custom_call.1} parent=27 // pred_region
          %502 = dma.done [#allocation5], 512
        $region48: #{tpu_custom_call.1} parent=27 // pred_fallthru
          _
        // Predicated region
        $region49: #{tpu_custom_call.1} parent=27 // pred_check
          %p503 = pneg %p167
        $region50: #{tpu_custom_call.1} parent=27 // pred_check_branch
          %505 = sbr.rel (%p503) target = $region52
        $region51: #{tpu_custom_call.1} parent=27 // pred_region
          %506 = dma.done [#allocation5], 512
        $region52: #{tpu_custom_call.1} parent=27 // pred_fallthru
          _
      $region28: #{tpu_custom_call.1} parent=5 // pred_fallthru
        _
      %p507 = scmp.le.s32.totalorder 2, %s15
      // Predicated region
      $region53: #{tpu_custom_call.1} parent=5 // pred_check
        %p508 = pneg %p507
      $region54: #{tpu_custom_call.1} parent=5 // pred_check_branch
        %510 = sbr.rel (%p508) target = $region56
      $region55: #{tpu_custom_call.1} parent=5 // pred_region
        %s511 = ssub.s32 %s15, 2
        // Predicated region
        $region57: #{tpu_custom_call.1} parent=55 // pred_check
          %p512 = pneg %p121
        $region58: #{tpu_custom_call.1} parent=55 // pred_check_branch
          %514 = sbr.rel (%p512) target = $region60
        $region59: #{tpu_custom_call.1} parent=55 // pred_region
          %s515 = sand.u32 %s106, 1
          %s516 = scalar_lea.sflag [#allocation3], %s515
          %s517 = sand.u32 %s106, 1
          %s518 = smul.addr %s517, 32
          %s519 = scalar_lea.vmem [#allocation2], %s518
          %520 = dma.done %s516, 512
        $region60: #{tpu_custom_call.1} parent=55 // pred_fallthru
          _
      $region56: #{tpu_custom_call.1} parent=5 // pred_fallthru
        _
    $region6: #{tpu_custom_call.1} parent=1 // loop_footer
      %s19 = sadd.s32 1, %s15
    $region7: #{tpu_custom_call.1} parent=1 // loop_footer_branch
      %14 = sbr.rel target = $region3
    $region8: #{tpu_custom_call.1} parent=1 // loop_exit
      _
    %521 = vsyncpa [#allocation3], 1
    %s522 = scalar_lea.sflag [#allocation3], 1
    %523 = vsyncpa %s522, 1
    %524 = vsyncpa [#allocation5], 1

</llo_original>
